<compile_context>
chip_gen: v5e
topology: v5e:2x2
jax: 0.10.0
libtpu: 0.0.40
codegen_flags: <defaults>
</compile_context>

<pallas_src>
import jax
import jax.numpy as jnp
from jax.experimental import pallas as pl
from jax.experimental.pallas import tpu as pltpu

_LANE = 128


def _round_up(n, m):
    return ((n + m - 1) // m) * m


def _mlp_kernel(x_ref, w1_ref, b1_ref, w2_ref, b2_ref, w3_ref, b3_ref, o_ref):
    x = x_ref[...]                                   # (4, TB)   batch on lanes
    w1 = w1_ref[...]                                 # (64, 4)

    # Layer 1 (contraction K=4): 4 broadcast FMAs on the VPU.
    h1 = w1[:, 0:1] * x[0:1, :]                      # (64,1)*(1,TB) -> (64,TB)
    for k in range(1, 4):
        h1 = h1 + w1[:, k:k + 1] * x[k:k + 1, :]
    h1 = jnp.maximum(h1 + b1_ref[...], 0.0)          # (64, TB)

    # Layer 2: 64x64 matmul on the MXU, f32 accumulation.
    h2 = jnp.dot(w2_ref[...], h1, preferred_element_type=jnp.float32)
    h2 = jnp.maximum(h2 + b2_ref[...], 0.0)          # (64, TB)

    # Layer 3: (4,64) @ (64,TB) -> lane-dense (4, TB) output tile.
    o = jnp.dot(w3_ref[...], h2, preferred_element_type=jnp.float32) + b3_ref[...]
    o_ref[...] = o.astype(o_ref.dtype)


def perocyte_forward(x, params, *, tile_b=4096):
    """Equivalent of PerocyteModel.forward: x [..., 4] -> [N, 4] float32."""
    w1, b1, w2, b2, w3, b3 = params
    x2 = x.reshape(-1, 4).astype(jnp.float32)
    B = x2.shape[0]

    # Batch-on-lanes layout: [4, B]
    xt = x2.T

    # Tile choice: lane-dense (multiple of 128), large enough to amortize the
    # per-grid-step overhead, and >=2 grid steps when the batch is big enough
    # (v7x has 2 TensorCores). VMEM at TB=4096: ~2 MiB of activations + tiny
    # x/out tiles + ~17 KiB of resident weights -> well inside every chip's limit.
    b128 = _round_up(B, _LANE)
    if b128 <= _LANE:
        tile = _LANE
    else:
        tile = min(_round_up(tile_b, _LANE), _round_up(pl.cdiv(b128, 2), _LANE))
    Bp = _round_up(b128, tile)
    pad = Bp - B
    if pad:
        xt = jnp.pad(xt, ((0, 0), (0, pad)))
    grid = (Bp // tile,)

    rep = lambda shape: pl.BlockSpec(shape, lambda i: (0, 0))

    out_t = pl.pallas_call(
        _mlp_kernel,
        out_shape=jax.ShapeDtypeStruct((4, Bp), jnp.float32),
        grid_spec=pltpu.PrefetchScalarGridSpec(
            num_scalar_prefetch=0,
            grid=grid,
            in_specs=[
                pl.BlockSpec((4, tile), lambda i: (0, i)),   # x.T tile
                rep((64, 4)),    # W1  [out, in]
                rep((64, 1)),    # b1
                rep((64, 64)),   # W2
                rep((64, 1)),    # b2
                rep((4, 64)),    # W3
                rep((4, 1)),     # b3
            ],
            out_specs=pl.BlockSpec((4, tile), lambda i: (0, i)),
        ),
        compiler_params=pltpu.CompilerParams(
            dimension_semantics=("parallel",)),
    )(xt, w1, b1, w2, b2, w3, b3)

    out = out_t[:, :B].T            # back to [B, 4]
    # PyTorch: .view(-1, 4)
    return out.reshape(-1, 4)


def init_params(key):
    """Deterministic init matching PyTorch nn.Linear shapes ([out, in] weights)."""
    ks = jax.random.split(key, 6)

    def linear(kw, kb, fan_in, fan_out):
        bound = 1.0 / jnp.sqrt(fan_in)
        w = jax.random.uniform(kw, (fan_out, fan_in), jnp.float32, -bound, bound)
        b = jax.random.uniform(kb, (fan_out, 1), jnp.float32, -bound, bound)
        return w, b

    w1, b1 = linear(ks[0], ks[1], 4, 64)
    w2, b2 = linear(ks[2], ks[3], 64, 64)
    w3, b3 = linear(ks[4], ks[5], 64, 4)
    return (w1, b1, w2, b2, w3, b3)


def reference_forward(x, params):
    w1, b1, w2, b2, w3, b3 = params
    x2 = x.reshape(-1, 4)
    h1 = jnp.maximum(x2 @ w1.T + b1[:, 0], 0.0)
    h2 = jnp.maximum(h1 @ w2.T + b2[:, 0], 0.0)
    return (h2 @ w3.T + b3[:, 0]).reshape(-1, 4)


if __name__ == "__main__":
    key = jax.random.PRNGKey(0)
    kx, kp = jax.random.split(key)

    B = 16
    x = jax.random.normal(kx, (B, 4), dtype=jnp.float32)
    params = init_params(kp)

    out = perocyte_forward(x, params)
    out = jax.block_until_ready(out)

    ref = reference_forward(x, params)
    assert out.shape == (B, 4), out.shape
    assert jnp.allclose(out, ref, atol=1e-4, rtol=1e-4), "mismatch vs reference"

    print("KERNEL_OK")
</pallas_src>

<mosaic_0001>
module attributes {stable_mosaic.version = 11 : i64} {
  func.func @_mlp_kernel(%arg0: i32, %arg1: memref<4x128xf32, #tpu.memory_space<vmem>>, %arg2: memref<64x4xf32, #tpu.memory_space<vmem>>, %arg3: memref<64x1xf32, #tpu.memory_space<vmem>>, %arg4: memref<64x64xf32, #tpu.memory_space<vmem>>, %arg5: memref<64x1xf32, #tpu.memory_space<vmem>>, %arg6: memref<4x64xf32, #tpu.memory_space<vmem>>, %arg7: memref<4x1xf32, #tpu.memory_space<vmem>>, %arg8: memref<4x128xf32, #tpu.memory_space<vmem>>) attributes {dimension_semantics = [#tpu.dimension_semantics<parallel>], iteration_bounds = array<i64: 1>, scalar_prefetch = 0 : i64, scratch_operands = 0 : i64, tpu.core_type = #tpu.core_type<tc>, window_params = [{transform_indices = @transform_0, window_bounds = array<i64: 4, 128>}, {pipeline_mode = #tpu.pipeline_mode<synchronous>, transform_indices = @transform_1, window_bounds = array<i64: 64, 4>}, {pipeline_mode = #tpu.pipeline_mode<synchronous>, transform_indices = @transform_2, window_bounds = array<i64: 64, 1>}, {pipeline_mode = #tpu.pipeline_mode<synchronous>, transform_indices = @transform_3, window_bounds = array<i64: 64, 64>}, {pipeline_mode = #tpu.pipeline_mode<synchronous>, transform_indices = @transform_4, window_bounds = array<i64: 64, 1>}, {pipeline_mode = #tpu.pipeline_mode<synchronous>, transform_indices = @transform_5, window_bounds = array<i64: 4, 64>}, {pipeline_mode = #tpu.pipeline_mode<synchronous>, transform_indices = @transform_6, window_bounds = array<i64: 4, 1>}, {transform_indices = @transform_7, window_bounds = array<i64: 4, 128>}]} {
    %c0 = arith.constant 0 : index
    %c0_0 = arith.constant 0 : index
    %0 = vector.load %arg1[%c0, %c0_0] : memref<4x128xf32, #tpu.memory_space<vmem>>, vector<4x128xf32>
    %c0_1 = arith.constant 0 : index
    %c0_2 = arith.constant 0 : index
    %1 = vector.load %arg2[%c0_1, %c0_2] : memref<64x4xf32, #tpu.memory_space<vmem>>, vector<64x4xf32>
    %2 = vector.extract_strided_slice %1 {offsets = [0, 0], sizes = [64, 1], strides = [1, 1]} : vector<64x4xf32> to vector<64x1xf32>
    %3 = vector.extract_strided_slice %0 {offsets = [0, 0], sizes = [1, 128], strides = [1, 1]} : vector<4x128xf32> to vector<1x128xf32>
    %4 = vector.broadcast %2 : vector<64x1xf32> to vector<64x128xf32>
    %5 = vector.broadcast %3 : vector<1x128xf32> to vector<64x128xf32>
    %6 = arith.mulf %4, %5 : vector<64x128xf32>
    %7 = vector.extract_strided_slice %1 {offsets = [0, 1], sizes = [64, 1], strides = [1, 1]} : vector<64x4xf32> to vector<64x1xf32>
    %8 = vector.extract_strided_slice %0 {offsets = [1, 0], sizes = [1, 128], strides = [1, 1]} : vector<4x128xf32> to vector<1x128xf32>
    %9 = vector.broadcast %7 : vector<64x1xf32> to vector<64x128xf32>
    %10 = vector.broadcast %8 : vector<1x128xf32> to vector<64x128xf32>
    %11 = arith.mulf %9, %10 : vector<64x128xf32>
    %12 = arith.addf %6, %11 : vector<64x128xf32>
    %13 = vector.extract_strided_slice %1 {offsets = [0, 2], sizes = [64, 1], strides = [1, 1]} : vector<64x4xf32> to vector<64x1xf32>
    %14 = vector.extract_strided_slice %0 {offsets = [2, 0], sizes = [1, 128], strides = [1, 1]} : vector<4x128xf32> to vector<1x128xf32>
    %15 = vector.broadcast %13 : vector<64x1xf32> to vector<64x128xf32>
    %16 = vector.broadcast %14 : vector<1x128xf32> to vector<64x128xf32>
    %17 = arith.mulf %15, %16 : vector<64x128xf32>
    %18 = arith.addf %12, %17 : vector<64x128xf32>
    %19 = vector.extract_strided_slice %1 {offsets = [0, 3], sizes = [64, 1], strides = [1, 1]} : vector<64x4xf32> to vector<64x1xf32>
    %20 = vector.extract_strided_slice %0 {offsets = [3, 0], sizes = [1, 128], strides = [1, 1]} : vector<4x128xf32> to vector<1x128xf32>
    %21 = vector.broadcast %19 : vector<64x1xf32> to vector<64x128xf32>
    %22 = vector.broadcast %20 : vector<1x128xf32> to vector<64x128xf32>
    %23 = arith.mulf %21, %22 : vector<64x128xf32>
    %24 = arith.addf %18, %23 : vector<64x128xf32>
    %c0_3 = arith.constant 0 : index
    %c0_4 = arith.constant 0 : index
    %25 = vector.load %arg3[%c0_3, %c0_4] : memref<64x1xf32, #tpu.memory_space<vmem>>, vector<64x1xf32>
    %26 = vector.broadcast %25 : vector<64x1xf32> to vector<64x128xf32>
    %27 = arith.addf %24, %26 : vector<64x128xf32>
    %cst = arith.constant 0.000000e+00 : f32
    %28 = vector.broadcast %cst : f32 to vector<64x128xf32>
    %29 = arith.maximumf %27, %28 : vector<64x128xf32>
    %c0_5 = arith.constant 0 : index
    %c0_6 = arith.constant 0 : index
    %30 = vector.load %arg4[%c0_5, %c0_6] : memref<64x64xf32, #tpu.memory_space<vmem>>, vector<64x64xf32>
    %cst_7 = arith.constant dense<0.000000e+00> : vector<64x128xf32>
    %31 = tpu.matmul %30, %29, %cst_7 {dimension_numbers = #tpu.dot_dimension_numbers<[1], [0], [0], [1], [0, 0, 1, 1], [], []>} : vector<64x64xf32>, vector<64x128xf32>, vector<64x128xf32> -> vector<64x128xf32>
    %c0_8 = arith.constant 0 : index
    %c0_9 = arith.constant 0 : index
    %32 = vector.load %arg5[%c0_8, %c0_9] : memref<64x1xf32, #tpu.memory_space<vmem>>, vector<64x1xf32>
    %33 = vector.broadcast %32 : vector<64x1xf32> to vector<64x128xf32>
    %34 = arith.addf %31, %33 : vector<64x128xf32>
    %cst_10 = arith.constant 0.000000e+00 : f32
    %35 = vector.broadcast %cst_10 : f32 to vector<64x128xf32>
    %36 = arith.maximumf %34, %35 : vector<64x128xf32>
    %c0_11 = arith.constant 0 : index
    %c0_12 = arith.constant 0 : index
    %37 = vector.load %arg6[%c0_11, %c0_12] : memref<4x64xf32, #tpu.memory_space<vmem>>, vector<4x64xf32>
    %cst_13 = arith.constant dense<0.000000e+00> : vector<4x128xf32>
    %38 = tpu.matmul %37, %36, %cst_13 {dimension_numbers = #tpu.dot_dimension_numbers<[1], [0], [0], [1], [0, 0, 1, 1], [], []>} : vector<4x64xf32>, vector<64x128xf32>, vector<4x128xf32> -> vector<4x128xf32>
    %c0_14 = arith.constant 0 : index
    %c0_15 = arith.constant 0 : index
    %39 = vector.load %arg7[%c0_14, %c0_15] : memref<4x1xf32, #tpu.memory_space<vmem>>, vector<4x1xf32>
    %40 = vector.broadcast %39 : vector<4x1xf32> to vector<4x128xf32>
    %41 = arith.addf %38, %40 : vector<4x128xf32>
    %c0_16 = arith.constant 0 : index
    %c0_17 = arith.constant 0 : index
    %42 = vector.load %arg8[%c0_16, %c0_17] : memref<4x128xf32, #tpu.memory_space<vmem>>, vector<4x128xf32>
    tpu.vector_store %arg8[%c0_16, %c0_17], %41 {strides = array<i32>} : memref<4x128xf32, #tpu.memory_space<vmem>>, vector<4x128xf32>,
    return
  }
  func.func @transform_0(%arg0: i32) -> (i32, i32) {
    %c0_i32 = arith.constant 0 : i32
    %c0_i32_0 = arith.constant 0 : i32
    return %c0_i32, %arg0 : i32, i32
  }
  func.func @transform_1(%arg0: i32) -> (i32, i32) {
    %c0_i32 = arith.constant 0 : i32
    %c0_i32_0 = arith.constant 0 : i32
    %c0_i32_1 = arith.constant 0 : i32
    return %c0_i32, %c0_i32_0 : i32, i32
  }
  func.func @transform_2(%arg0: i32) -> (i32, i32) {
    %c0_i32 = arith.constant 0 : i32
    %c0_i32_0 = arith.constant 0 : i32
    %c0_i32_1 = arith.constant 0 : i32
    return %c0_i32, %c0_i32_0 : i32, i32
  }
  func.func @transform_3(%arg0: i32) -> (i32, i32) {
    %c0_i32 = arith.constant 0 : i32
    %c0_i32_0 = arith.constant 0 : i32
    %c0_i32_1 = arith.constant 0 : i32
    return %c0_i32, %c0_i32_0 : i32, i32
  }
  func.func @transform_4(%arg0: i32) -> (i32, i32) {
    %c0_i32 = arith.constant 0 : i32
    %c0_i32_0 = arith.constant 0 : i32
    %c0_i32_1 = arith.constant 0 : i32
    return %c0_i32, %c0_i32_0 : i32, i32
  }
  func.func @transform_5(%arg0: i32) -> (i32, i32) {
    %c0_i32 = arith.constant 0 : i32
    %c0_i32_0 = arith.constant 0 : i32
    %c0_i32_1 = arith.constant 0 : i32
    return %c0_i32, %c0_i32_0 : i32, i32
  }
  func.func @transform_6(%arg0: i32) -> (i32, i32) {
    %c0_i32 = arith.constant 0 : i32
    %c0_i32_0 = arith.constant 0 : i32
    %c0_i32_1 = arith.constant 0 : i32
    return %c0_i32, %c0_i32_0 : i32, i32
  }
  func.func @transform_7(%arg0: i32) -> (i32, i32) {
    %c0_i32 = arith.constant 0 : i32
    %c0_i32_0 = arith.constant 0 : i32
    return %c0_i32, %arg0 : i32, i32
  }
}

</mosaic_0001>

<llo_original>
// kernel: tpu_custom_call.1
$region0: #{tpu_custom_call.1}
  #allocation0 [shape = 'u32[]', space=smem, size = 0x4, offset = 0x4, fixed_abs, tag = 'smem constant byte address 0x4 - core index']
  #allocation1 [shape = 'u32[72,128]{1,0:T(1,128)}', space=vmem, size = 0x9000, scoped, tag = 'internal scratch']
  %s0 = inlined_call_operand.vmem [shape: f32[4,128], index: 0, kind: input, shape index: {}]
  %s1 = inlined_call_operand.vmem [shape: f32[64,4], index: 1, kind: input, shape index: {}]
  %s2 = inlined_call_operand.vmem [shape: f32[64,1], index: 2, kind: input, shape index: {}]
  %s3 = inlined_call_operand.vmem [shape: f32[64,64], index: 3, kind: input, shape index: {}]
  %s4 = inlined_call_operand.vmem [shape: f32[64,1], index: 4, kind: input, shape index: {}]
  %s5 = inlined_call_operand.vmem [shape: f32[4,64], index: 5, kind: input, shape index: {}]
  %s6 = inlined_call_operand.vmem [shape: f32[4,1], index: 6, kind: input, shape index: {}]
  %s7 = inlined_call_operand.hbm [shape: f32[4,128], index: 7, kind: output, shape index: {}]
  %s8 = sld [smem:[#allocation0]]
  $region38: #{tpu_custom_call.1} parent=0
    _
  %s10 = ssub.s32 1, %s8
  %s11 = scalar_select 0, %s10, %s8
  $region1: #{tpu_custom_call.1} parent=0
    #allocation2 [shape = 'u8[2048]{0}', space=vmem, size = 0x800, scoped, tag = 'output window, operand 0, single buffered']
    #allocation3 [shape = 's32[1]{0}', space=sflag, size = 0x4, scoped, tag = 'scoped memory for tpu_custom_call.1']
    %12 = vsyncpa [#allocation3], 0
    // Predicated region
    $region2: #{tpu_custom_call.1} parent=1 // pred_check
      _
    $region3: #{tpu_custom_call.1} parent=1 // pred_check_branch
      %14 = sbr.rel (0) target = $region5
    $region4: #{tpu_custom_call.1} parent=1 // pred_region
      _
    $region5: #{tpu_custom_call.1} parent=1 // pred_fallthru
      _
    // Predicated region
    $region6: #{tpu_custom_call.1} parent=1 // pred_check
      _
    $region7: #{tpu_custom_call.1} parent=1 // pred_check_branch
      %16 = sbr.rel (0) target = $region9
    $region8: #{tpu_custom_call.1} parent=1 // pred_region
      _
    $region9: #{tpu_custom_call.1} parent=1 // pred_fallthru
      _
    // Predicated region
    $region10: #{tpu_custom_call.1} parent=1 // pred_check
      _
    $region11: #{tpu_custom_call.1} parent=1 // pred_check_branch
      %18 = sbr.rel (0) target = $region13
    $region12: #{tpu_custom_call.1} parent=1 // pred_region
      _
    $region13: #{tpu_custom_call.1} parent=1 // pred_fallthru
      _
    // Predicated region
    $region14: #{tpu_custom_call.1} parent=1 // pred_check
      _
    $region15: #{tpu_custom_call.1} parent=1 // pred_check_branch
      %20 = sbr.rel (0) target = $region17
    $region16: #{tpu_custom_call.1} parent=1 // pred_region
      _
    $region17: #{tpu_custom_call.1} parent=1 // pred_fallthru
      _
    // Predicated region
    $region18: #{tpu_custom_call.1} parent=1 // pred_check
      _
    $region19: #{tpu_custom_call.1} parent=1 // pred_check_branch
      %22 = sbr.rel (0) target = $region21
    $region20: #{tpu_custom_call.1} parent=1 // pred_region
      _
    $region21: #{tpu_custom_call.1} parent=1 // pred_fallthru
      _
    // Predicated region
    $region22: #{tpu_custom_call.1} parent=1 // pred_check
      _
    $region23: #{tpu_custom_call.1} parent=1 // pred_check_branch
      %24 = sbr.rel (0) target = $region25
    $region24: #{tpu_custom_call.1} parent=1 // pred_region
      _
    $region25: #{tpu_custom_call.1} parent=1 // pred_fallthru
      _
    // Predicated region
    $region26: #{tpu_custom_call.1} parent=1 // pred_check
      _
    $region27: #{tpu_custom_call.1} parent=1 // pred_check_branch
      %26 = sbr.rel (0) target = $region29
    $region28: #{tpu_custom_call.1} parent=1 // pred_region
      _
    $region29: #{tpu_custom_call.1} parent=1 // pred_fallthru
      _
    %v27 = vld [vmem:[%s0] sm:$0xf]
    %v28 = vld [vmem:[%s1] sm:$0xff]
    %v29 = vld [vmem:[%s1 + $0x8] sm:$0xff]
    %v30 = vld [vmem:[%s1 + $0x10] sm:$0xff]
    %v31 = vld [vmem:[%s1 + $0x18] sm:$0xff]
    %v32 = vld [vmem:[%s1 + $0x20] sm:$0xff]
    %v33 = vld [vmem:[%s1 + $0x28] sm:$0xff]
    %v34 = vld [vmem:[%s1 + $0x30] sm:$0xff]
    %v35 = vld [vmem:[%s1 + $0x38] sm:$0xff]
    %37 = vset.pattern.permute.xlu0 0
    %38 = vperm.xlu0 %37, %v28
    %v39 = vpop.permute.xlu0 %38
    %42 = vset.pattern.permute.xlu0 0
    %43 = vperm.xlu0 %42, %v29
    %v44 = vpop.permute.xlu0 %43
    %47 = vset.pattern.permute.xlu0 0
    %48 = vperm.xlu0 %47, %v30
    %v49 = vpop.permute.xlu0 %48
    %52 = vset.pattern.permute.xlu0 0
    %53 = vperm.xlu0 %52, %v31
    %v54 = vpop.permute.xlu0 %53
    %57 = vset.pattern.permute.xlu0 0
    %58 = vperm.xlu0 %57, %v32
    %v59 = vpop.permute.xlu0 %58
    %62 = vset.pattern.permute.xlu0 0
    %63 = vperm.xlu0 %62, %v33
    %v64 = vpop.permute.xlu0 %63
    %67 = vset.pattern.permute.xlu0 0
    %68 = vperm.xlu0 %67, %v34
    %v69 = vpop.permute.xlu0 %68
    %72 = vset.pattern.permute.xlu0 0
    %73 = vperm.xlu0 %72, %v35
    %v74 = vpop.permute.xlu0 %73
    %v76 = vperm.slane %v27, 0
    %v77 = vmul.f32 %v39, %v76
    %v78 = vmul.f32 %v44, %v76
    %v79 = vmul.f32 %v49, %v76
    %v80 = vmul.f32 %v54, %v76
    %v81 = vmul.f32 %v59, %v76
    %v82 = vmul.f32 %v64, %v76
    %v83 = vmul.f32 %v69, %v76
    %v84 = vmul.f32 %v74, %v76
    %85 = vset.pattern.permute.xlu0 1
    %86 = vperm.xlu0 %85, %v28
    %v87 = vpop.permute.xlu0 %86
    %89 = vset.pattern.permute.xlu0 1
    %90 = vperm.xlu0 %89, %v29
    %v91 = vpop.permute.xlu0 %90
    %93 = vset.pattern.permute.xlu0 1
    %94 = vperm.xlu0 %93, %v30
    %v95 = vpop.permute.xlu0 %94
    %97 = vset.pattern.permute.xlu0 1
    %98 = vperm.xlu0 %97, %v31
    %v99 = vpop.permute.xlu0 %98
    %101 = vset.pattern.permute.xlu0 1
    %102 = vperm.xlu0 %101, %v32
    %v103 = vpop.permute.xlu0 %102
    %105 = vset.pattern.permute.xlu0 1
    %106 = vperm.xlu0 %105, %v33
    %v107 = vpop.permute.xlu0 %106
    %109 = vset.pattern.permute.xlu0 1
    %110 = vperm.xlu0 %109, %v34
    %v111 = vpop.permute.xlu0 %110
    %113 = vset.pattern.permute.xlu0 1
    %114 = vperm.xlu0 %113, %v35
    %v115 = vpop.permute.xlu0 %114
    %v117 = vperm.slane %v27, 1
    %v118 = vmul.f32 %v87, %v117
    %v119 = vmul.f32 %v91, %v117
    %v120 = vmul.f32 %v95, %v117
    %v121 = vmul.f32 %v99, %v117
    %v122 = vmul.f32 %v103, %v117
    %v123 = vmul.f32 %v107, %v117
    %v124 = vmul.f32 %v111, %v117
    %v125 = vmul.f32 %v115, %v117
    %v126 = vadd.f32 %v77, %v118
    %v127 = vadd.f32 %v78, %v119
    %v128 = vadd.f32 %v79, %v120
    %v129 = vadd.f32 %v80, %v121
    %v130 = vadd.f32 %v81, %v122
    %v131 = vadd.f32 %v82, %v123
    %v132 = vadd.f32 %v83, %v124
    %v133 = vadd.f32 %v84, %v125
    %134 = vset.pattern.permute.xlu0 2
    %135 = vperm.xlu0 %134, %v28
    %v136 = vpop.permute.xlu0 %135
    %138 = vset.pattern.permute.xlu0 2
    %139 = vperm.xlu0 %138, %v29
    %v140 = vpop.permute.xlu0 %139
    %142 = vset.pattern.permute.xlu0 2
    %143 = vperm.xlu0 %142, %v30
    %v144 = vpop.permute.xlu0 %143
    %146 = vset.pattern.permute.xlu0 2
    %147 = vperm.xlu0 %146, %v31
    %v148 = vpop.permute.xlu0 %147
    %150 = vset.pattern.permute.xlu0 2
    %151 = vperm.xlu0 %150, %v32
    %v152 = vpop.permute.xlu0 %151
    %154 = vset.pattern.permute.xlu0 2
    %155 = vperm.xlu0 %154, %v33
    %v156 = vpop.permute.xlu0 %155
    %158 = vset.pattern.permute.xlu0 2
    %159 = vperm.xlu0 %158, %v34
    %v160 = vpop.permute.xlu0 %159
    %162 = vset.pattern.permute.xlu0 2
    %163 = vperm.xlu0 %162, %v35
    %v164 = vpop.permute.xlu0 %163
    %v166 = vperm.slane %v27, 2
    %v167 = vmul.f32 %v136, %v166
    %v168 = vmul.f32 %v140, %v166
    %v169 = vmul.f32 %v144, %v166
    %v170 = vmul.f32 %v148, %v166
    %v171 = vmul.f32 %v152, %v166
    %v172 = vmul.f32 %v156, %v166
    %v173 = vmul.f32 %v160, %v166
    %v174 = vmul.f32 %v164, %v166
    %v175 = vadd.f32 %v126, %v167
    %v176 = vadd.f32 %v127, %v168
    %v177 = vadd.f32 %v128, %v169
    %v178 = vadd.f32 %v129, %v170
    %v179 = vadd.f32 %v130, %v171
    %v180 = vadd.f32 %v131, %v172
    %v181 = vadd.f32 %v132, %v173
    %v182 = vadd.f32 %v133, %v174
    %183 = vset.pattern.permute.xlu0 3
    %184 = vperm.xlu0 %183, %v28
    %v185 = vpop.permute.xlu0 %184
    %187 = vset.pattern.permute.xlu0 3
    %188 = vperm.xlu0 %187, %v29
    %v189 = vpop.permute.xlu0 %188
    %191 = vset.pattern.permute.xlu0 3
    %192 = vperm.xlu0 %191, %v30
    %v193 = vpop.permute.xlu0 %192
    %195 = vset.pattern.permute.xlu0 3
    %196 = vperm.xlu0 %195, %v31
    %v197 = vpop.permute.xlu0 %196
    %199 = vset.pattern.permute.xlu0 3
    %200 = vperm.xlu0 %199, %v32
    %v201 = vpop.permute.xlu0 %200
    %203 = vset.pattern.permute.xlu0 3
    %204 = vperm.xlu0 %203, %v33
    %v205 = vpop.permute.xlu0 %204
    %207 = vset.pattern.permute.xlu0 3
    %208 = vperm.xlu0 %207, %v34
    %v209 = vpop.permute.xlu0 %208
    %211 = vset.pattern.permute.xlu0 3
    %212 = vperm.xlu0 %211, %v35
    %v213 = vpop.permute.xlu0 %212
    %v215 = vperm.slane %v27, 3
    %v216 = vmul.f32 %v185, %v215
    %v217 = vmul.f32 %v189, %v215
    %v218 = vmul.f32 %v193, %v215
    %v219 = vmul.f32 %v197, %v215
    %v220 = vmul.f32 %v201, %v215
    %v221 = vmul.f32 %v205, %v215
    %v222 = vmul.f32 %v209, %v215
    %v223 = vmul.f32 %v213, %v215
    %v224 = vadd.f32 %v175, %v216
    %v225 = vadd.f32 %v176, %v217
    %v226 = vadd.f32 %v177, %v218
    %v227 = vadd.f32 %v178, %v219
    %v228 = vadd.f32 %v179, %v220
    %v229 = vadd.f32 %v180, %v221
    %v230 = vadd.f32 %v181, %v222
    %v231 = vadd.f32 %v182, %v223
    %v232 = vld [vmem:[%s2] sm:$0xff]
    %v233 = vld [vmem:[%s2 + $0x8] sm:$0xff]
    %v234 = vld [vmem:[%s2 + $0x10] sm:$0xff]
    %v235 = vld [vmem:[%s2 + $0x18] sm:$0xff]
    %v236 = vld [vmem:[%s2 + $0x20] sm:$0xff]
    %v237 = vld [vmem:[%s2 + $0x28] sm:$0xff]
    %v238 = vld [vmem:[%s2 + $0x30] sm:$0xff]
    %v239 = vld [vmem:[%s2 + $0x38] sm:$0xff]
    %241 = vset.pattern.permute.xlu0 0
    %242 = vperm.xlu0 %241, %v232
    %v243 = vpop.permute.xlu0 %242
    %246 = vset.pattern.permute.xlu0 0
    %247 = vperm.xlu0 %246, %v233
    %v248 = vpop.permute.xlu0 %247
    %251 = vset.pattern.permute.xlu0 0
    %252 = vperm.xlu0 %251, %v234
    %v253 = vpop.permute.xlu0 %252
    %256 = vset.pattern.permute.xlu0 0
    %257 = vperm.xlu0 %256, %v235
    %v258 = vpop.permute.xlu0 %257
    %261 = vset.pattern.permute.xlu0 0
    %262 = vperm.xlu0 %261, %v236
    %v263 = vpop.permute.xlu0 %262
    %266 = vset.pattern.permute.xlu0 0
    %267 = vperm.xlu0 %266, %v237
    %v268 = vpop.permute.xlu0 %267
    %271 = vset.pattern.permute.xlu0 0
    %272 = vperm.xlu0 %271, %v238
    %v273 = vpop.permute.xlu0 %272
    %276 = vset.pattern.permute.xlu0 0
    %277 = vperm.xlu0 %276, %v239
    %v278 = vpop.permute.xlu0 %277
    %v280 = vadd.f32 %v224, %v243
    %v281 = vadd.f32 %v225, %v248
    %v282 = vadd.f32 %v226, %v253
    %v283 = vadd.f32 %v227, %v258
    %v284 = vadd.f32 %v228, %v263
    %v285 = vadd.f32 %v229, %v268
    %v286 = vadd.f32 %v230, %v273
    %v287 = vadd.f32 %v231, %v278
    %v288 = vmax.f32 %v280, 0.0
    %v289 = vmax.f32 %v281, 0.0
    %v290 = vmax.f32 %v282, 0.0
    %v291 = vmax.f32 %v283, 0.0
    %v292 = vmax.f32 %v284, 0.0
    %v293 = vmax.f32 %v285, 0.0
    %v294 = vmax.f32 %v286, 0.0
    %v295 = vmax.f32 %v287, 0.0
    %v296 = vld [vmem:[%s3] sm:$0xff]
    %v297 = vld [vmem:[%s3 + $0x8] sm:$0xff]
    %v298 = vld [vmem:[%s3 + $0x10] sm:$0xff]
    %v299 = vld [vmem:[%s3 + $0x18] sm:$0xff]
    %v300 = vld [vmem:[%s3 + $0x20] sm:$0xff]
    %v301 = vld [vmem:[%s3 + $0x28] sm:$0xff]
    %v302 = vld [vmem:[%s3 + $0x30] sm:$0xff]
    %v303 = vld [vmem:[%s3 + $0x38] sm:$0xff]
    %v304 = vld [vmem:[%s4] sm:$0xff]
    %v305 = vld [vmem:[%s4 + $0x8] sm:$0xff]
    %v306 = vld [vmem:[%s4 + $0x10] sm:$0xff]
    %v307 = vld [vmem:[%s4 + $0x18] sm:$0xff]
    %v308 = vld [vmem:[%s4 + $0x20] sm:$0xff]
    %v309 = vld [vmem:[%s4 + $0x28] sm:$0xff]
    %v310 = vld [vmem:[%s4 + $0x30] sm:$0xff]
    %v311 = vld [vmem:[%s4 + $0x38] sm:$0xff]
    %313 = vset.pattern.permute.xlu0 0
    %314 = vperm.xlu0 %313, %v304
    %v315 = vpop.permute.xlu0 %314
    %318 = vset.pattern.permute.xlu0 0
    %319 = vperm.xlu0 %318, %v305
    %v320 = vpop.permute.xlu0 %319
    %323 = vset.pattern.permute.xlu0 0
    %324 = vperm.xlu0 %323, %v306
    %v325 = vpop.permute.xlu0 %324
    %328 = vset.pattern.permute.xlu0 0
    %329 = vperm.xlu0 %328, %v307
    %v330 = vpop.permute.xlu0 %329
    %333 = vset.pattern.permute.xlu0 0
    %334 = vperm.xlu0 %333, %v308
    %v335 = vpop.permute.xlu0 %334
    %338 = vset.pattern.permute.xlu0 0
    %339 = vperm.xlu0 %338, %v309
    %v340 = vpop.permute.xlu0 %339
    %343 = vset.pattern.permute.xlu0 0
    %344 = vperm.xlu0 %343, %v310
    %v345 = vpop.permute.xlu0 %344
    %348 = vset.pattern.permute.xlu0 0
    %349 = vperm.xlu0 %348, %v311
    %v350 = vpop.permute.xlu0 %349
    %vm352 = vcmask 523264
    %v354 = vsel %vm352, %v296, 0
    %v357 = vsel %vm352, %v297, 0
    %v360 = vsel %vm352, %v298, 0
    %v363 = vsel %vm352, %v299, 0
    %v366 = vsel %vm352, %v300, 0
    %v369 = vsel %vm352, %v301, 0
    %v372 = vsel %vm352, %v302, 0
    %v375 = vsel %vm352, %v303, 0
    %377 = vmatpush.msra.mxu0 0.0
    %378 = vmatpush.msra.mxu0 0.0
    %379 = vmatpush.msra.mxu0 0.0
    %380 = vmatpush.msra.mxu0 0.0
    %381 = vmatpush.msra.mxu0 0.0
    %382 = vmatpush.msra.mxu0 0.0
    %383 = vmatpush.msra.mxu0 0.0
    %384 = vmatpush.msra.mxu0 0.0
    %385 = vmatpush.msra.mxu0 %v295
    %386 = vmatpush.msra.mxu0 %v294
    %387 = vmatpush.msra.mxu0 %v293
    %388 = vmatpush.msra.mxu0 %v292
    %389 = vmatpush.msra.mxu0 %v291
    %390 = vmatpush.msra.mxu0 %v290
    %391 = vmatpush.msra.mxu0 %v289
    %392 = vmatpush.msra.mxu0 %v288
    %393 = vmatmul.f32.gmra.mxu0 %v354
    %v394 = vpop.f32.mrf.mxu0
    %v395 = vadd.f32 %v315, %v394
    %396 = vmatmul.f32.gmra.mxu0 %v357
    %v397 = vpop.f32.mrf.mxu0
    %v398 = vadd.f32 %v320, %v397
    %399 = vmatmul.f32.gmra.mxu0 %v360
    %v400 = vpop.f32.mrf.mxu0
    %v401 = vadd.f32 %v325, %v400
    %402 = vmatmul.f32.gmra.mxu0 %v363
    %v403 = vpop.f32.mrf.mxu0
    %v404 = vadd.f32 %v330, %v403
    %405 = vmatmul.f32.gmra.mxu0 %v366
    %v406 = vpop.f32.mrf.mxu0
    %v407 = vadd.f32 %v335, %v406
    %408 = vmatmul.f32.gmra.mxu0 %v369
    %v409 = vpop.f32.mrf.mxu0
    %v410 = vadd.f32 %v340, %v409
    %411 = vmatmul.f32.gmra.mxu0 %v372
    %v412 = vpop.f32.mrf.mxu0
    %v413 = vadd.f32 %v345, %v412
    %414 = vmatmul.f32.gmra.mxu0 %v375
    %v415 = vpop.f32.mrf.mxu0
    %v416 = vadd.f32 %v350, %v415
    %417 = vdwg.mxu0
    %v418 = vmax.f32 %v395, 0.0
    %v419 = vmax.f32 %v398, 0.0
    %v420 = vmax.f32 %v401, 0.0
    %v421 = vmax.f32 %v404, 0.0
    %v422 = vmax.f32 %v407, 0.0
    %v423 = vmax.f32 %v410, 0.0
    %v424 = vmax.f32 %v413, 0.0
    %v425 = vmax.f32 %v416, 0.0
    %v426 = vld [vmem:[%s5] sm:$0xf]
    %v427 = vld [vmem:[%s6] sm:$0xf]
    %429 = vset.pattern.permute.xlu0 0
    %430 = vperm.xlu0 %429, %v427
    %v431 = vpop.permute.xlu0 %430
    %v434 = vsel %vm352, %v426, 0
    %436 = vmatpush.msra.mxu0 0.0
    %437 = vmatpush.msra.mxu0 0.0
    %438 = vmatpush.msra.mxu0 0.0
    %439 = vmatpush.msra.mxu0 0.0
    %440 = vmatpush.msra.mxu0 0.0
    %441 = vmatpush.msra.mxu0 0.0
    %442 = vmatpush.msra.mxu0 0.0
    %443 = vmatpush.msra.mxu0 0.0
    %444 = vmatpush.msra.mxu0 %v425
    %445 = vmatpush.msra.mxu0 %v424
    %446 = vmatpush.msra.mxu0 %v423
    %447 = vmatpush.msra.mxu0 %v422
    %448 = vmatpush.msra.mxu0 %v421
    %449 = vmatpush.msra.mxu0 %v420
    %450 = vmatpush.msra.mxu0 %v419
    %451 = vmatpush.msra.mxu0 %v418
    %452 = vmatmul.f32.gmra.mxu0 %v434
    %v453 = vpop.f32.mrf.mxu0
    %v454 = vadd.f32 %v431, %v453
    %455 = vdwg.mxu0
    %456 = vst [vmem:[#allocation2] sm:$0xf] %v454
    // Predicated region
    $region30: #{tpu_custom_call.1} parent=1 // pred_check
      _
    $region31: #{tpu_custom_call.1} parent=1 // pred_check_branch
      %458 = sbr.rel (0) target = $region33
    $region32: #{tpu_custom_call.1} parent=1 // pred_region
      %460 = vsyncadd [#allocation3], 0
      %s462 = sshll.u32 [#allocation2], 4
      %s463 = int_to_ptr.vmem [resolvable:$true] %s462
      %s464 = sshll.u32 %s7, 4
      %s465 = int_to_ptr.hbm [resolvable:$true] %s464
      %467 = dma.vmem_to_hbm [thread:$0]  %s463, 64, %s465, [#allocation3]
    $region33: #{tpu_custom_call.1} parent=1 // pred_fallthru
      _
    // Predicated region
    $region34: #{tpu_custom_call.1} parent=1 // pred_check
      _
    $region35: #{tpu_custom_call.1} parent=1 // pred_check_branch
      %469 = sbr.rel (0) target = $region37
    $region36: #{tpu_custom_call.1} parent=1 // pred_region
      %471 = dma.done [#allocation3], 64
    $region37: #{tpu_custom_call.1} parent=1 // pred_fallthru
      _
    %472 = vsyncpa [#allocation3], 1

</llo_original>
